<compile_context>
chip_gen: v6e
topology: v6e:2x2x1
jax: 0.10.0
libtpu: 0.0.40
codegen_flags: <defaults>
</compile_context>

<pallas_src>
import functools
import math

import jax
import jax.numpy as jnp
from jax.experimental import pallas as pl
from jax.experimental.pallas import tpu as pltpu

IGNORE_INDEX = -100
LANE = 128
NEG_LOG_EPS = -math.log(1e-4)   # -log(clamp(onehot)=1e-4) for non-target classes


def _cdiv(a, b):
    return -(-a // b)


def _tpu_vmem_bytes():
    """Best-effort query of per-core VMEM capacity (None if unavailable)."""
    try:
        return int(getattr(pltpu.get_tpu_info(), "vmem_capacity_bytes"))
    except Exception:
        return None


def _fold_rows(v):
    """Fold (R, L) f32 partials into an (8, L) accumulator tile.

    R % 8 == 0 (streaming path): a leading-dim regroup -> pure vreg adds.
    Otherwise (tiny full-extent tiles only): one sublane reduce placed in row 0."""
    R, L = v.shape
    if R % 8 == 0:
        return jnp.sum(v.reshape(R // 8, 8, L), axis=0)
    row0 = jax.lax.broadcasted_iota(jnp.int32, (8, L), 0) == 0
    return jnp.where(row0, jnp.sum(v, axis=0, keepdims=True), 0.0)


def _sce_kernel(logits_ref, tgt_ref, out_ref, *, ignore_index, tile_rows,
                rows_total, tiles_per_split, need_row_mask):
    """Grid = (batch, row_split, pixel_row_tile).  out_ref (3, 8, L) is the
    per-(batch, split) accumulator: [0]=sum CE, [1]=sum RCE, [2]=valid count."""
    i = pl.program_id(2)

    @pl.when(i == 0)
    def _():
        out_ref[...] = jnp.zeros_like(out_ref)

    t = tgt_ref[...]
    if t.dtype != jnp.int32:
        t = t.astype(jnp.int32)
    R, L = t.shape
    C = logits_ref.shape[0]

    # Pass 1 over classes (static unroll, no 3-D iota / one-hot):
    # running max + logit of the target class via compare+select.
    m = None
    x_t = None
    for c in range(C):
        xc = logits_ref[c].astype(jnp.float32)          # (R, L)
        m = xc if m is None else jnp.maximum(m, xc)
        x_t = jnp.where(t == c, xc, 0.0 if x_t is None else x_t)

    # Pass 2: softmax denominator — single exp per class, no (C,R,L) temporary.
    s = None
    for c in range(C):
        e = jnp.exp(logits_ref[c].astype(jnp.float32) - m)
        s = e if s is None else s + e

    lse = m + jnp.log(s)
    ce_pix = lse - x_t                        # -log_softmax[target]
    p_t = jnp.exp(-ce_pix)                    # softmax[target]  (EUP, no divide)
    # RCE = -log(1e-4) * sum_{c != t} clamp(p_c, 1e-7, 1)  ~=  K * (1 - p_t)
    # (ignores the 1e-7 floor on non-target classes; <= ~3e-6 absolute / pixel)
    rce_pix = NEG_LOG_EPS * (1.0 - p_t)

    valid = t != ignore_index
    if need_row_mask:
        # Only emitted when the grid overshoots the real pixel rows; the
        # unspecified data in partial/over-run blocks is masked out here.
        tile_g = pl.program_id(1) * tiles_per_split + i
        row_id = tile_g * tile_rows + jax.lax.broadcasted_iota(jnp.int32, (R, L), 0)
        valid = jnp.logical_and(valid, row_id < rows_total)

    zeros = jnp.zeros_like(ce_pix)
    out_ref[0] += _fold_rows(jnp.where(valid, ce_pix, zeros))
    out_ref[1] += _fold_rows(jnp.where(valid, rce_pix, zeros))
    out_ref[2] += _fold_rows(valid.astype(jnp.float32))


def symmetric_cross_entropy_loss(inputs, targets, *, alpha, beta,
                                 num_classes=None, ignore_index=IGNORE_INDEX,
                                 max_tile_rows=None, num_row_splits=None,
                                 vmem_limit_bytes=None):
    """inputs:  (B, C, H, W) logits, f32 or bf16 (bf16 streams as bf16).
       targets: (B, H, W) integer class labels (ignore_index allowed).
       returns: scalar float32 loss.  All-ignore input yields NaN (as PyTorch)."""
    B, C, H, W = inputs.shape
    if num_classes is not None:
        assert C == num_classes
    HW = H * W

    # Targets: keep int32 as-is (no extra cast pass); widen other dtypes.
    tgt = targets if targets.dtype == jnp.int32 else targets.astype(jnp.int32)

    if HW % LANE == 0:
        # Lane-aligned fast path: free (bitcast) reshapes only, full lane density.
        L, R = LANE, HW // LANE
        logits_v = inputs.reshape(B, C, R, L)
        tgt_v = tgt.reshape(B, R, L)
    else:
        # Zero-copy fallback: keep NCHW, W on the lane axis (full-dim block),
        # no host-side pad/copy of the logits.
        L, R = W, H
        logits_v = inputs
        tgt_v = tgt

    # ---- generation-aware tiling --------------------------------------------
    vmem = _tpu_vmem_bytes()
    big_vmem = vmem is not None and vmem >= 96 * 1024 * 1024     # v5e / v6e
    if vmem_limit_bytes is None:
        vmem_limit_bytes = (64 if big_vmem else 48) * 1024 * 1024
    if max_tile_rows is None:
        max_tile_rows = 2048 if big_vmem else 1024               # v7x: 64 MiB VMEM

    itemsize = inputs.dtype.itemsize
    row_align = max(8, 32 // itemsize)            # 8 f32 / 16 bf16 / 32 int8
    # keep one (double-buffered) logits block around <= ~8 MiB
    rows_by_vmem = max(row_align, (8 * 1024 * 1024) // max(1, C * L * itemsize))
    tile_cap = max(row_align, min(max_tile_rows, rows_by_vmem))

    if R <= tile_cap:
        tile_r = R                                 # full-extent block: always legal
    else:
        tile_r = max(row_align, (tile_cap // row_align) * row_align)
    n_tiles = _cdiv(R, tile_r)

    # Second "parallel" axis over the row range so both v7x cores stay busy
    # when B is 1 / odd; harmless (near-zero overhead) on v5e / v6e.
    if num_row_splits is None:
        num_row_splits = 2 if (B % 2 == 1) else 1
    S = num_row_splits if n_tiles >= 2 else 1
    tiles_per_split = _cdiv(n_tiles, S)

    need_row_mask = (S * tiles_per_split * tile_r) != R
    overshoot = (S * tiles_per_split) > n_tiles

    def _blk(s, i):
        g = s * tiles_per_split + i
        return jnp.minimum(g, n_tiles - 1) if overshoot else g

    kernel = functools.partial(
        _sce_kernel, ignore_index=ignore_index, tile_rows=tile_r, rows_total=R,
        tiles_per_split=tiles_per_split, need_row_mask=need_row_mask)

    partials = pl.pallas_call(
        kernel,
        out_shape=jax.ShapeDtypeStruct((B, S, 3, 8, L), jnp.float32),
        grid_spec=pltpu.PrefetchScalarGridSpec(
            num_scalar_prefetch=0,
            grid=(B, S, tiles_per_split),
            in_specs=[
                pl.BlockSpec((None, C, tile_r, L),
                             lambda b, s, i: (b, 0, _blk(s, i), 0)),
                pl.BlockSpec((None, tile_r, L),
                             lambda b, s, i: (b, _blk(s, i), 0)),
            ],
            out_specs=pl.BlockSpec((None, None, 3, 8, L),
                                   lambda b, s, i: (b, s, 0, 0, 0)),
        ),
        compiler_params=pltpu.CompilerParams(
            dimension_semantics=("parallel", "parallel", "arbitrary"),
            vmem_limit_bytes=vmem_limit_bytes,
        ),
    )(logits_v, tgt_v)

    # Tiny final reduction + combine in plain JAX (combine counts BEFORE dividing).
    sums = jnp.sum(partials, axis=(0, 1, 3, 4))     # [ce_sum, rce_sum, count]
    return (float(alpha) * sums[0] + float(beta) * sums[1]) / sums[2]


def _reference(inputs, targets, *, alpha, beta, ignore_index=IGNORE_INDEX):
    """Pure-JAX reference mirroring the PyTorch module."""
    B, C, H, W = inputs.shape
    x = jnp.transpose(inputs, (0, 2, 3, 1)).reshape(-1, C).astype(jnp.float32)
    t = targets.reshape(-1)
    valid = t != ignore_index
    logp = jax.nn.log_softmax(x, axis=-1)
    t_safe = jnp.where(valid, t, 0)
    ce_pix = -jnp.take_along_axis(logp, t_safe[:, None], axis=-1)[:, 0]
    cnt = jnp.sum(valid)
    ce = jnp.sum(jnp.where(valid, ce_pix, 0.0)) / cnt
    pred = jnp.clip(jax.nn.softmax(x, axis=-1), 1e-7, 1.0)
    oh = jnp.clip(jax.nn.one_hot(t_safe, C), 1e-4, 1.0)
    rce_pix = -jnp.sum(pred * jnp.log(oh), axis=-1)
    rce = jnp.sum(jnp.where(valid, rce_pix, 0.0)) / cnt
    return alpha * ce + beta * rce


if __name__ == "__main__":
    key = jax.random.PRNGKey(0)
    alpha, beta = 0.5, 1.0
    k1, k2, k3, k4, k5, k6 = jax.random.split(key, 6)

    # Case 1: canonical small shape (B=2, C=4, 16x16), f32, lane-aligned fast path.
    B, C, H, W = 2, 4, 16, 16
    inputs = jax.random.normal(k1, (B, C, H, W), dtype=jnp.float32)
    targets = jax.random.randint(k2, (B, H, W), 0, C, dtype=jnp.int32)
    targets = targets.at[0, 0, :4].set(IGNORE_INDEX)      # exercise ignore_index
    loss = jax.block_until_ready(
        symmetric_cross_entropy_loss(inputs, targets, alpha=alpha, beta=beta))
    ref = _reference(inputs, targets, alpha=alpha, beta=beta)
    assert jnp.allclose(loss, ref, rtol=1e-4, atol=1e-5), (loss, ref)

    # Case 2: non-lane-aligned 50x50 -> zero-copy NCHW path (W on lanes), forced
    # multi-tile streaming + 2-way row split (ragged-tail mask + overshoot clamp).
    B2, H2, W2 = 2, 50, 50
    inputs2 = jax.random.normal(k3, (B2, C, H2, W2), dtype=jnp.float32)
    targets2 = jax.random.randint(k4, (B2, H2, W2), 0, C, dtype=jnp.int32)
    targets2 = targets2.at[1, 5, :7].set(IGNORE_INDEX)
    loss2 = jax.block_until_ready(
        symmetric_cross_entropy_loss(inputs2, targets2, alpha=alpha, beta=beta,
                                     max_tile_rows=8, num_row_splits=2))
    ref2 = _reference(inputs2, targets2, alpha=alpha, beta=beta)
    assert jnp.allclose(loss2, ref2, rtol=1e-4, atol=1e-5), (loss2, ref2)

    # Case 3: bf16 logits streamed as bf16, B=1 (default 2-way row split for v7x),
    # forced small tile to exercise the 16-row bf16 min-tile guard.
    B3, H3, W3 = 1, 32, 128
    inputs3 = jax.random.normal(k5, (B3, C, H3, W3),
                                dtype=jnp.float32).astype(jnp.bfloat16)
    targets3 = jax.random.randint(k6, (B3, H3, W3), 0, C, dtype=jnp.int32)
    loss3 = jax.block_until_ready(
        symmetric_cross_entropy_loss(inputs3, targets3, alpha=alpha, beta=beta,
                                     max_tile_rows=16))
    ref3 = _reference(inputs3, targets3, alpha=alpha, beta=beta)
    assert jnp.allclose(loss3, ref3, rtol=1e-4, atol=1e-5), (loss3, ref3)

    print("KERNEL_OK")
</pallas_src>

<mosaic_0001>
module attributes {stable_mosaic.version = 11 : i64} {
  func.func @_sce_kernel(%arg0: i32, %arg1: i32, %arg2: i32, %arg3: memref<1x4x2x128xf32, #tpu.memory_space<vmem>>, %arg4: memref<1x2x128xi32, #tpu.memory_space<vmem>>, %arg5: memref<1x1x3x8x128xf32, #tpu.memory_space<vmem>>) attributes {dimension_semantics = [#tpu.dimension_semantics<parallel>, #tpu.dimension_semantics<parallel>, #tpu.dimension_semantics<arbitrary>], iteration_bounds = array<i64: 2, 1, 1>, scalar_prefetch = 0 : i64, scratch_operands = 0 : i64, tpu.core_type = #tpu.core_type<tc>, window_params = [{transform_indices = @transform_0, window_bounds = array<i64: 1, 4, 2, 128>}, {transform_indices = @transform_1, window_bounds = array<i64: 1, 2, 128>}, {transform_indices = @transform_2, window_bounds = array<i64: 1, 1, 3, 8, 128>}]} {
    %c0_i32 = arith.constant 0 : i32
    %0 = arith.cmpi eq, %arg2, %c0_i32 : i32
    %1 = arith.extui %0 : i1 to i32
    %c0_i32_0 = arith.constant 0 : i32
    %2 = arith.cmpi ne, %1, %c0_i32_0 : i32
    scf.if %2 {
      %cst_76 = arith.constant 0.000000e+00 : f32
      %110 = vector.broadcast %cst_76 : f32 to vector<3x8x128xf32>
      %c0_77 = arith.constant 0 : index
      %c0_78 = arith.constant 0 : index
      %c0_79 = arith.constant 0 : index
      %c0_80 = arith.constant 0 : index
      %c0_81 = arith.constant 0 : index
      %111 = vector.load %arg5[%c0_77, %c0_78, %c0_79, %c0_80, %c0_81] : memref<1x1x3x8x128xf32, #tpu.memory_space<vmem>>, vector<1x1x3x8x128xf32>
      %112 = vector.shape_cast %111 : vector<1x1x3x8x128xf32> to vector<3x8x128xf32>
      %113 = vector.shape_cast %110 : vector<3x8x128xf32> to vector<1x1x3x8x128xf32>
      tpu.vector_store %arg5[%c0_77, %c0_78, %c0_79, %c0_80, %c0_81], %113 {strides = array<i32>} : memref<1x1x3x8x128xf32, #tpu.memory_space<vmem>>, vector<1x1x3x8x128xf32>,
    } else {
    }
    %c0 = arith.constant 0 : index
    %c0_1 = arith.constant 0 : index
    %c0_2 = arith.constant 0 : index
    %3 = vector.load %arg4[%c0, %c0_1, %c0_2] : memref<1x2x128xi32, #tpu.memory_space<vmem>>, vector<1x2x128xi32>
    %4 = vector.shape_cast %3 : vector<1x2x128xi32> to vector<2x128xi32>
    %c0_3 = arith.constant 0 : index
    %c0_4 = arith.constant 0 : index
    %c0_5 = arith.constant 0 : index
    %c0_6 = arith.constant 0 : index
    %5 = vector.load %arg3[%c0_3, %c0_4, %c0_5, %c0_6] : memref<1x4x2x128xf32, #tpu.memory_space<vmem>>, vector<1x1x2x128xf32>
    %6 = vector.shape_cast %5 : vector<1x1x2x128xf32> to vector<2x128xf32>
    %c0_i32_7 = arith.constant 0 : i32
    %7 = vector.broadcast %c0_i32_7 : i32 to vector<2x128xi32>
    %8 = arith.cmpi eq, %4, %7 : vector<2x128xi32>
    %cst = arith.constant 0.000000e+00 : f32
    %9 = vector.broadcast %cst : f32 to vector<2x128xf32>
    %10 = arith.select %8, %6, %9 : vector<2x128xi1>, vector<2x128xf32>
    %c0_8 = arith.constant 0 : index
    %c1 = arith.constant 1 : index
    %c0_9 = arith.constant 0 : index
    %c0_10 = arith.constant 0 : index
    %11 = vector.load %arg3[%c0_8, %c1, %c0_9, %c0_10] : memref<1x4x2x128xf32, #tpu.memory_space<vmem>>, vector<1x1x2x128xf32>
    %12 = vector.shape_cast %11 : vector<1x1x2x128xf32> to vector<2x128xf32>
    %13 = arith.maximumf %6, %12 : vector<2x128xf32>
    %c1_i32 = arith.constant 1 : i32
    %14 = vector.broadcast %c1_i32 : i32 to vector<2x128xi32>
    %15 = arith.cmpi eq, %4, %14 : vector<2x128xi32>
    %16 = arith.select %15, %12, %10 : vector<2x128xi1>, vector<2x128xf32>
    %c0_11 = arith.constant 0 : index
    %c2 = arith.constant 2 : index
    %c0_12 = arith.constant 0 : index
    %c0_13 = arith.constant 0 : index
    %17 = vector.load %arg3[%c0_11, %c2, %c0_12, %c0_13] : memref<1x4x2x128xf32, #tpu.memory_space<vmem>>, vector<1x1x2x128xf32>
    %18 = vector.shape_cast %17 : vector<1x1x2x128xf32> to vector<2x128xf32>
    %19 = arith.maximumf %13, %18 : vector<2x128xf32>
    %c2_i32 = arith.constant 2 : i32
    %20 = vector.broadcast %c2_i32 : i32 to vector<2x128xi32>
    %21 = arith.cmpi eq, %4, %20 : vector<2x128xi32>
    %22 = arith.select %21, %18, %16 : vector<2x128xi1>, vector<2x128xf32>
    %c0_14 = arith.constant 0 : index
    %c3 = arith.constant 3 : index
    %c0_15 = arith.constant 0 : index
    %c0_16 = arith.constant 0 : index
    %23 = vector.load %arg3[%c0_14, %c3, %c0_15, %c0_16] : memref<1x4x2x128xf32, #tpu.memory_space<vmem>>, vector<1x1x2x128xf32>
    %24 = vector.shape_cast %23 : vector<1x1x2x128xf32> to vector<2x128xf32>
    %25 = arith.maximumf %19, %24 : vector<2x128xf32>
    %c3_i32 = arith.constant 3 : i32
    %26 = vector.broadcast %c3_i32 : i32 to vector<2x128xi32>
    %27 = arith.cmpi eq, %4, %26 : vector<2x128xi32>
    %28 = arith.select %27, %24, %22 : vector<2x128xi1>, vector<2x128xf32>
    %c0_17 = arith.constant 0 : index
    %c0_18 = arith.constant 0 : index
    %c0_19 = arith.constant 0 : index
    %c0_20 = arith.constant 0 : index
    %29 = vector.load %arg3[%c0_17, %c0_18, %c0_19, %c0_20] : memref<1x4x2x128xf32, #tpu.memory_space<vmem>>, vector<1x1x2x128xf32>
    %30 = vector.shape_cast %29 : vector<1x1x2x128xf32> to vector<2x128xf32>
    %31 = arith.subf %30, %25 : vector<2x128xf32>
    %32 = math.exp %31 : vector<2x128xf32>
    %c0_21 = arith.constant 0 : index
    %c1_22 = arith.constant 1 : index
    %c0_23 = arith.constant 0 : index
    %c0_24 = arith.constant 0 : index
    %33 = vector.load %arg3[%c0_21, %c1_22, %c0_23, %c0_24] : memref<1x4x2x128xf32, #tpu.memory_space<vmem>>, vector<1x1x2x128xf32>
    %34 = vector.shape_cast %33 : vector<1x1x2x128xf32> to vector<2x128xf32>
    %35 = arith.subf %34, %25 : vector<2x128xf32>
    %36 = math.exp %35 : vector<2x128xf32>
    %37 = arith.addf %32, %36 : vector<2x128xf32>
    %c0_25 = arith.constant 0 : index
    %c2_26 = arith.constant 2 : index
    %c0_27 = arith.constant 0 : index
    %c0_28 = arith.constant 0 : index
    %38 = vector.load %arg3[%c0_25, %c2_26, %c0_27, %c0_28] : memref<1x4x2x128xf32, #tpu.memory_space<vmem>>, vector<1x1x2x128xf32>
    %39 = vector.shape_cast %38 : vector<1x1x2x128xf32> to vector<2x128xf32>
    %40 = arith.subf %39, %25 : vector<2x128xf32>
    %41 = math.exp %40 : vector<2x128xf32>
    %42 = arith.addf %37, %41 : vector<2x128xf32>
    %c0_29 = arith.constant 0 : index
    %c3_30 = arith.constant 3 : index
    %c0_31 = arith.constant 0 : index
    %c0_32 = arith.constant 0 : index
    %43 = vector.load %arg3[%c0_29, %c3_30, %c0_31, %c0_32] : memref<1x4x2x128xf32, #tpu.memory_space<vmem>>, vector<1x1x2x128xf32>
    %44 = vector.shape_cast %43 : vector<1x1x2x128xf32> to vector<2x128xf32>
    %45 = arith.subf %44, %25 : vector<2x128xf32>
    %46 = math.exp %45 : vector<2x128xf32>
    %47 = arith.addf %42, %46 : vector<2x128xf32>
    %48 = math.log %47 : vector<2x128xf32>
    %49 = arith.addf %25, %48 : vector<2x128xf32>
    %50 = arith.subf %49, %28 : vector<2x128xf32>
    %cst_33 = arith.constant 0.000000e+00 : f32
    %51 = vector.broadcast %cst_33 : f32 to vector<2x128xf32>
    %52 = arith.subf %51, %50 : vector<2x128xf32>
    %53 = math.exp %52 : vector<2x128xf32>
    %cst_34 = arith.constant 1.000000e+00 : f32
    %54 = vector.broadcast %cst_34 : f32 to vector<2x128xf32>
    %55 = arith.subf %54, %53 : vector<2x128xf32>
    %cst_35 = arith.constant 9.21034049 : f32
    %56 = vector.broadcast %cst_35 : f32 to vector<2x128xf32>
    %57 = arith.mulf %56, %55 : vector<2x128xf32>
    %c-100_i32 = arith.constant -100 : i32
    %58 = vector.broadcast %c-100_i32 : i32 to vector<2x128xi32>
    %59 = arith.cmpi ne, %4, %58 : vector<2x128xi32>
    %cst_36 = arith.constant 0.000000e+00 : f32
    %60 = vector.broadcast %cst_36 : f32 to vector<2x128xf32>
    %c0_37 = arith.constant 0 : index
    %c0_38 = arith.constant 0 : index
    %c0_39 = arith.constant 0 : index
    %c0_40 = arith.constant 0 : index
    %c0_41 = arith.constant 0 : index
    %61 = vector.load %arg5[%c0_37, %c0_38, %c0_39, %c0_40, %c0_41] : memref<1x1x3x8x128xf32, #tpu.memory_space<vmem>>, vector<1x1x1x8x128xf32>
    %62 = vector.shape_cast %61 : vector<1x1x1x8x128xf32> to vector<8x128xf32>
    %63 = arith.select %59, %50, %60 : vector<2x128xi1>, vector<2x128xf32>
    %64 = tpu.iota {dimensions = array<i32: 0>} : vector<8x128xi32>
    %c0_i32_42 = arith.constant 0 : i32
    %65 = vector.broadcast %c0_i32_42 : i32 to vector<8x128xi32>
    %66 = arith.cmpi eq, %64, %65 : vector<8x128xi32>
    %cst_43 = arith.constant dense<0.000000e+00> : vector<128xf32>
    %67 = vector.multi_reduction <add>, %63, %cst_43 [0] : vector<2x128xf32> to vector<128xf32>
    %68 = vector.shape_cast %67 : vector<128xf32> to vector<1x128xf32>
    %cst_44 = arith.constant 0.000000e+00 : f32
    %69 = vector.shape_cast %68 : vector<1x128xf32> to vector<1x128xf32>
    %70 = vector.broadcast %69 : vector<1x128xf32> to vector<8x128xf32>
    %71 = vector.broadcast %cst_44 : f32 to vector<8x128xf32>
    %72 = arith.select %66, %70, %71 : vector<8x128xi1>, vector<8x128xf32>
    %73 = arith.addf %62, %72 : vector<8x128xf32>
    %c0_45 = arith.constant 0 : index
    %c0_46 = arith.constant 0 : index
    %c0_47 = arith.constant 0 : index
    %c0_48 = arith.constant 0 : index
    %c0_49 = arith.constant 0 : index
    %74 = vector.load %arg5[%c0_45, %c0_46, %c0_47, %c0_48, %c0_49] : memref<1x1x3x8x128xf32, #tpu.memory_space<vmem>>, vector<1x1x1x8x128xf32>
    %75 = vector.shape_cast %74 : vector<1x1x1x8x128xf32> to vector<8x128xf32>
    %76 = vector.shape_cast %73 : vector<8x128xf32> to vector<1x1x1x8x128xf32>
    tpu.vector_store %arg5[%c0_45, %c0_46, %c0_47, %c0_48, %c0_49], %76 {strides = array<i32>} : memref<1x1x3x8x128xf32, #tpu.memory_space<vmem>>, vector<1x1x1x8x128xf32>,
    %c0_50 = arith.constant 0 : index
    %c0_51 = arith.constant 0 : index
    %c1_52 = arith.constant 1 : index
    %c0_53 = arith.constant 0 : index
    %c0_54 = arith.constant 0 : index
    %77 = vector.load %arg5[%c0_50, %c0_51, %c1_52, %c0_53, %c0_54] : memref<1x1x3x8x128xf32, #tpu.memory_space<vmem>>, vector<1x1x1x8x128xf32>
    %78 = vector.shape_cast %77 : vector<1x1x1x8x128xf32> to vector<8x128xf32>
    %79 = arith.select %59, %57, %60 : vector<2x128xi1>, vector<2x128xf32>
    %80 = tpu.iota {dimensions = array<i32: 0>} : vector<8x128xi32>
    %c0_i32_55 = arith.constant 0 : i32
    %81 = vector.broadcast %c0_i32_55 : i32 to vector<8x128xi32>
    %82 = arith.cmpi eq, %80, %81 : vector<8x128xi32>
    %cst_56 = arith.constant dense<0.000000e+00> : vector<128xf32>
    %83 = vector.multi_reduction <add>, %79, %cst_56 [0] : vector<2x128xf32> to vector<128xf32>
    %84 = vector.shape_cast %83 : vector<128xf32> to vector<1x128xf32>
    %cst_57 = arith.constant 0.000000e+00 : f32
    %85 = vector.shape_cast %84 : vector<1x128xf32> to vector<1x128xf32>
    %86 = vector.broadcast %85 : vector<1x128xf32> to vector<8x128xf32>
    %87 = vector.broadcast %cst_57 : f32 to vector<8x128xf32>
    %88 = arith.select %82, %86, %87 : vector<8x128xi1>, vector<8x128xf32>
    %89 = arith.addf %78, %88 : vector<8x128xf32>
    %c0_58 = arith.constant 0 : index
    %c0_59 = arith.constant 0 : index
    %c1_60 = arith.constant 1 : index
    %c0_61 = arith.constant 0 : index
    %c0_62 = arith.constant 0 : index
    %90 = vector.load %arg5[%c0_58, %c0_59, %c1_60, %c0_61, %c0_62] : memref<1x1x3x8x128xf32, #tpu.memory_space<vmem>>, vector<1x1x1x8x128xf32>
    %91 = vector.shape_cast %90 : vector<1x1x1x8x128xf32> to vector<8x128xf32>
    %92 = vector.shape_cast %89 : vector<8x128xf32> to vector<1x1x1x8x128xf32>
    tpu.vector_store %arg5[%c0_58, %c0_59, %c1_60, %c0_61, %c0_62], %92 {strides = array<i32>} : memref<1x1x3x8x128xf32, #tpu.memory_space<vmem>>, vector<1x1x1x8x128xf32>,
    %c0_63 = arith.constant 0 : index
    %c0_64 = arith.constant 0 : index
    %c2_65 = arith.constant 2 : index
    %c0_66 = arith.constant 0 : index
    %c0_67 = arith.constant 0 : index
    %93 = vector.load %arg5[%c0_63, %c0_64, %c2_65, %c0_66, %c0_67] : memref<1x1x3x8x128xf32, #tpu.memory_space<vmem>>, vector<1x1x1x8x128xf32>
    %94 = vector.shape_cast %93 : vector<1x1x1x8x128xf32> to vector<8x128xf32>
    %95 = arith.extui %59 : vector<2x128xi1> to vector<2x128xi32>
    %96 = arith.sitofp %95 : vector<2x128xi32> to vector<2x128xf32>
    %97 = tpu.iota {dimensions = array<i32: 0>} : vector<8x128xi32>
    %c0_i32_68 = arith.constant 0 : i32
    %98 = vector.broadcast %c0_i32_68 : i32 to vector<8x128xi32>
    %99 = arith.cmpi eq, %97, %98 : vector<8x128xi32>
    %cst_69 = arith.constant dense<0.000000e+00> : vector<128xf32>
    %100 = vector.multi_reduction <add>, %96, %cst_69 [0] : vector<2x128xf32> to vector<128xf32>
    %101 = vector.shape_cast %100 : vector<128xf32> to vector<1x128xf32>
    %cst_70 = arith.constant 0.000000e+00 : f32
    %102 = vector.shape_cast %101 : vector<1x128xf32> to vector<1x128xf32>
    %103 = vector.broadcast %102 : vector<1x128xf32> to vector<8x128xf32>
    %104 = vector.broadcast %cst_70 : f32 to vector<8x128xf32>
    %105 = arith.select %99, %103, %104 : vector<8x128xi1>, vector<8x128xf32>
    %106 = arith.addf %94, %105 : vector<8x128xf32>
    %c0_71 = arith.constant 0 : index
    %c0_72 = arith.constant 0 : index
    %c2_73 = arith.constant 2 : index
    %c0_74 = arith.constant 0 : index
    %c0_75 = arith.constant 0 : index
    %107 = vector.load %arg5[%c0_71, %c0_72, %c2_73, %c0_74, %c0_75] : memref<1x1x3x8x128xf32, #tpu.memory_space<vmem>>, vector<1x1x1x8x128xf32>
    %108 = vector.shape_cast %107 : vector<1x1x1x8x128xf32> to vector<8x128xf32>
    %109 = vector.shape_cast %106 : vector<8x128xf32> to vector<1x1x1x8x128xf32>
    tpu.vector_store %arg5[%c0_71, %c0_72, %c2_73, %c0_74, %c0_75], %109 {strides = array<i32>} : memref<1x1x3x8x128xf32, #tpu.memory_space<vmem>>, vector<1x1x1x8x128xf32>,
    return
  }
  func.func @transform_0(%arg0: i32, %arg1: i32, %arg2: i32) -> (i32, i32, i32, i32) {
    %c1_i32 = arith.constant 1 : i32
    %0 = arith.muli %arg1, %c1_i32 : i32
    %1 = arith.addi %0, %arg2 : i32
    %c0_i32 = arith.constant 0 : i32
    %c0_i32_0 = arith.constant 0 : i32
    %c0_i32_1 = arith.constant 0 : i32
    return %arg0, %c0_i32, %1, %c0_i32_0 : i32, i32, i32, i32
  }
  func.func @transform_1(%arg0: i32, %arg1: i32, %arg2: i32) -> (i32, i32, i32) {
    %c1_i32 = arith.constant 1 : i32
    %0 = arith.muli %arg1, %c1_i32 : i32
    %1 = arith.addi %0, %arg2 : i32
    %c0_i32 = arith.constant 0 : i32
    %c0_i32_0 = arith.constant 0 : i32
    return %arg0, %1, %c0_i32 : i32, i32, i32
  }
  func.func @transform_2(%arg0: i32, %arg1: i32, %arg2: i32) -> (i32, i32, i32, i32, i32) {
    %c0_i32 = arith.constant 0 : i32
    %c0_i32_0 = arith.constant 0 : i32
    %c0_i32_1 = arith.constant 0 : i32
    %c0_i32_2 = arith.constant 0 : i32
    return %arg0, %arg1, %c0_i32, %c0_i32_0, %c0_i32_1 : i32, i32, i32, i32, i32
  }
}

</mosaic_0001>

<llo_original>
// kernel: tpu_custom_call.1
$region0: #{tpu_custom_call.1}
  #allocation0 [shape = 'u32[]', space=smem, size = 0x4, offset = 0x4, fixed_abs, tag = 'smem constant byte address 0x4 - core index']
  #allocation1 [shape = 'u32[144,128]{1,0:T(1,128)}', space=vmem, size = 0x12000, scoped, tag = 'internal scratch']
  %s0 = inlined_call_operand.hbm [shape: f32[2,4,2,128], index: 0, kind: input, shape index: {}]
  %s1 = inlined_call_operand.hbm [shape: s32[2,2,128], index: 1, kind: input, shape index: {}]
  %s2 = inlined_call_operand.hbm [shape: f32[2,1,3,8,128], index: 2, kind: output, shape index: {}]
  %s3 = sld [smem:[#allocation0]]
  $region53: #{tpu_custom_call.1} parent=0
    _
  %s5 = ssub.s32 1, %s3
  %s6 = scalar_select 0, %s5, %s3
  $region1: #{tpu_custom_call.1} parent=0
    #allocation2 [shape = 'u8[8192]{0}', space=vmem, size = 0x2000, scoped, tag = 'input window, operand 0']
    #allocation3 [shape = 's32[2]{0}', space=sflag, size = 0x8, scoped, tag = 'scoped memory for tpu_custom_call.1']
    #allocation4 [shape = 's32[2]{0}', space=sflag, size = 0x8, scoped, tag = 'scoped memory for tpu_custom_call.1']
    #allocation5 [shape = 'u8[2048]{0}', space=vmem, size = 0x800, scoped, tag = 'input window, operand 1']
    #allocation6 [shape = 's32[2]{0}', space=sflag, size = 0x8, scoped, tag = 'scoped memory for tpu_custom_call.1']
    #allocation7 [shape = 'u8[24576]{0}', space=vmem, size = 0x6000, scoped, tag = 'output window, operand 0']
    %7 = vsyncpa [#allocation3], 0
    %s8 = scalar_lea.sflag [#allocation3], 1
    %9 = vsyncpa %s8, 0
    %10 = vsyncpa [#allocation6], 0
    %s11 = scalar_lea.sflag [#allocation6], 1
    %12 = vsyncpa %s11, 0
    %13 = vsyncpa [#allocation4], 0
    %s14 = scalar_lea.sflag [#allocation4], 1
    %15 = vsyncpa %s14, 0
    loop: start=0, step=1, limit=4
    $region2: #{tpu_custom_call.1} parent=1 // loop_pre_header
      _
    $region3: #{tpu_custom_call.1} parent=1 // loop_header
      %s17 = sphi 0, %s21
      %p18 = scmp.ge.s32.totalorder %s17, 4
      %s24 = sphi 0, %s43
      %s25 = sphi 0, %s39
      %s26 = sphi 0, %s35
      %s27 = sphi 0, %s24
      %s28 = sphi 0, %s25
      %s29 = sphi 0, %s26
      %s30 = sphi 0, %s27
      %s31 = sphi 0, %s28
      %s32 = sphi 0, %s29
      %s50 = sphi 0, %s52
      %s53 = sphi 0, %s50
      %s54 = sphi 0, %s53
      %s70 = sphi 0, %s54
      %s80 = sphi 0, %s82
      %s83 = sphi 0, %s80
      %s84 = sphi 0, %s83
      %s100 = sphi 0, %s84
      %s108 = sphi 0, %s110
      %s111 = sphi 0, %s108
      %s112 = sphi 0, %s111
      %s128 = sphi 0, %s112
    $region4: #{tpu_custom_call.1} parent=1 // loop_header_branch
      %20 = sbr.rel (%p18) target = $region8
    $region5: #{tpu_custom_call.1} parent=1 // loop_body
      %s22 = ssub.s32 %s17, 1
      %s23 = ssub.s32 %s17, 2
      %s33 = sadd.s32 1, %s26
      %p34 = scmp.ge.s32.totalorder %s33, 1
      %s35 = scalar_select %p34, 0, %s33
      %s36 = sadd.s32 1, %s25
      %s37 = scalar_select %p34, %s36, %s25
      %p38 = scmp.ge.s32.totalorder %s37, 1
      %s39 = scalar_select %p38, 0, %s37
      %s40 = sadd.s32 1, %s24
      %s41 = scalar_select %p38, %s40, %s24
      %p42 = scmp.ge.s32.totalorder %s41, 2
      %s43 = scalar_select %p42, 0, %s41
      %s44 = sadd.s32 %s25, %s26
      %s45 = sadd.s32 %s39, %s35
      %s46 = ssub.s32 %s24, %s43
      %s47 = ssub.s32 %s44, %s45
      %s48 = sor.u32 %s46, %s47
      %p49 = scmp.eq.s32.totalorder %s48, 0
      %s51 = sadd.s32 %s50, 1
      %s52 = scalar_select %p49, %s50, %s51
      %p55 = pneg %p49
      %p56 = scmp.eq.s32.totalorder %s17, 1
      %p57 = por %p55, %p56
      %p58 = scmp.ne.s32.totalorder %s50, %s53
      %p59 = scmp.eq.s32.totalorder %s17, 0
      %p60 = por %p58, %p59
      %p61 = scmp.ne.s32.totalorder %s50, %s53
      %p62 = scmp.eq.s32.totalorder %s22, 1
      %p63 = por %p61, %p62
      %p64 = scmp.ne.s32.totalorder %s53, %s54
      %p65 = scmp.eq.s32.totalorder %s22, 0
      %p66 = por %p64, %p65
      %p67 = scmp.ne.s32.totalorder %s53, %s54
      %p68 = scmp.eq.s32.totalorder %s23, 1
      %p69 = por %p67, %p68
      %p71 = scmp.ne.s32.totalorder %s54, %s70
      %p72 = scmp.eq.s32.totalorder %s23, 0
      %p73 = por %p71, %p72
      %s74 = sadd.s32 %s25, %s26
      %s75 = sadd.s32 %s39, %s35
      %s76 = ssub.s32 %s24, %s43
      %s77 = ssub.s32 %s74, %s75
      %s78 = sor.u32 %s76, %s77
      %p79 = scmp.eq.s32.totalorder %s78, 0
      %s81 = sadd.s32 %s80, 1
      %s82 = scalar_select %p79, %s80, %s81
      %p85 = pneg %p79
      %p86 = scmp.eq.s32.totalorder %s17, 1
      %p87 = por %p85, %p86
      %p88 = scmp.ne.s32.totalorder %s80, %s83
      %p89 = scmp.eq.s32.totalorder %s17, 0
      %p90 = por %p88, %p89
      %p91 = scmp.ne.s32.totalorder %s80, %s83
      %p92 = scmp.eq.s32.totalorder %s22, 1
      %p93 = por %p91, %p92
      %p94 = scmp.ne.s32.totalorder %s83, %s84
      %p95 = scmp.eq.s32.totalorder %s22, 0
      %p96 = por %p94, %p95
      %p97 = scmp.ne.s32.totalorder %s83, %s84
      %p98 = scmp.eq.s32.totalorder %s23, 1
      %p99 = por %p97, %p98
      %p101 = scmp.ne.s32.totalorder %s84, %s100
      %p102 = scmp.eq.s32.totalorder %s23, 0
      %p103 = por %p101, %p102
      %s104 = ssub.s32 %s24, %s43
      %s105 = ssub.s32 %s25, %s39
      %s106 = sor.u32 %s104, %s105
      %p107 = scmp.eq.s32.totalorder %s106, 0
      %s109 = sadd.s32 %s108, 1
      %s110 = scalar_select %p107, %s108, %s109
      %p113 = pneg %p107
      %p114 = scmp.eq.s32.totalorder %s17, 1
      %p115 = por %p113, %p114
      %p116 = scmp.ne.s32.totalorder %s108, %s111
      %p117 = scmp.eq.s32.totalorder %s17, 0
      %p118 = por %p116, %p117
      %p119 = scmp.ne.s32.totalorder %s108, %s111
      %p120 = scmp.eq.s32.totalorder %s22, 1
      %p121 = por %p119, %p120
      %p122 = scmp.ne.s32.totalorder %s111, %s112
      %p123 = scmp.eq.s32.totalorder %s22, 0
      %p124 = por %p122, %p123
      %p125 = scmp.ne.s32.totalorder %s111, %s112
      %p126 = scmp.eq.s32.totalorder %s23, 1
      %p127 = por %p125, %p126
      %p129 = scmp.ne.s32.totalorder %s112, %s128
      %p130 = scmp.eq.s32.totalorder %s23, 0
      %p131 = por %p129, %p130
      %p132 = scmp.le.s32.totalorder 1, %s17
      %p133 = scmp.lt.s32.totalorder %s17, 3
      %p134 = pnand %p132, %p133
      %p135 = pneg %p134
      // Predicated region
      $region9: #{tpu_custom_call.1} parent=5 // pred_check
        _
      $region10: #{tpu_custom_call.1} parent=5 // pred_check_branch
        %137 = sbr.rel (%p134) target = $region12
      $region11: #{tpu_custom_call.1} parent=5 // pred_region
        %s138 = ssub.s32 %s17, 1
      $region12: #{tpu_custom_call.1} parent=5 // pred_fallthru
        _
      %p139 = scmp.lt.s32.totalorder %s17, 2
      // Predicated region
      $region13: #{tpu_custom_call.1} parent=5 // pred_check
        %p140 = pneg %p139
      $region14: #{tpu_custom_call.1} parent=5 // pred_check_branch
        %142 = sbr.rel (%p140) target = $region16
      $region15: #{tpu_custom_call.1} parent=5 // pred_region
        // Predicated region
        $region17: #{tpu_custom_call.1} parent=15 // pred_check
          %p143 = pneg %p60
        $region18: #{tpu_custom_call.1} parent=15 // pred_check_branch
          %145 = sbr.rel (%p143) target = $region20
        $region19: #{tpu_custom_call.1} parent=15 // pred_region
          %s146 = sand.u32 %s50, 1
          %s147 = scalar_lea.sflag [#allocation3], %s146
          %s148 = sand.u32 %s50, 1
          %s149 = smul.addr %s148, 8
          %s150 = scalar_lea.vmem [#allocation2], %s149
          %s151 = sadd.s32 %s25, %s26
          %s153 = ssub.s32 128, 128
          %154 = vsyncadd %s147, %s153
          %s155 = smul.addr %s24, 4
          %s156 = sadd.s32 %s151, %s155
          %s157 = smul.addr %s156, 32
          %s158 = scalar_lea.hbm %s0, %s157
          %s159 = sshll.u32 %s150, 4
          %s160 = int_to_ptr.vmem [resolvable:$true] %s159
          %165 = dma.hbm_to_vmem [thread:$0]  %s158, 128, %s160, %s147, 32, 32, 2
        $region20: #{tpu_custom_call.1} parent=15 // pred_fallthru
          _
        // Predicated region
        $region21: #{tpu_custom_call.1} parent=15 // pred_check
          %p166 = pneg %p90
        $region22: #{tpu_custom_call.1} parent=15 // pred_check_branch
          %168 = sbr.rel (%p166) target = $region24
        $region23: #{tpu_custom_call.1} parent=15 // pred_region
          %s169 = sand.u32 %s80, 1
          %s170 = scalar_lea.sflag [#allocation6], %s169
          %s171 = sand.u32 %s80, 1
          %s172 = smul.addr %s171, 2
          %s173 = scalar_lea.vmem [#allocation5], %s172
          %s174 = sadd.s32 %s25, %s26
          %s176 = ssub.s32 32, 32
          %177 = vsyncadd %s170, %s176
          %s178 = sadd.s32 %s174, %s24
          %s179 = smul.addr %s178, 32
          %s180 = scalar_lea.hbm %s1, %s179
          %s182 = sshll.u32 %s173, 4
          %s183 = int_to_ptr.vmem [resolvable:$true] %s182
          %185 = dma.hbm_to_vmem [thread:$0]  %s180, 32, %s183, %s170
        $region24: #{tpu_custom_call.1} parent=15 // pred_fallthru
          _
      $region16: #{tpu_custom_call.1} parent=5 // pred_fallthru
        _
      %p186 = scmp.le.s32.totalorder 1, %s17
      %p187 = scmp.lt.s32.totalorder %s17, 3
      %p188 = pnand %p186, %p187
      %p189 = pneg %p188
      // Predicated region
      $region25: #{tpu_custom_call.1} parent=5 // pred_check
        _
      $region26: #{tpu_custom_call.1} parent=5 // pred_check_branch
        %191 = sbr.rel (%p188) target = $region28
      $region27: #{tpu_custom_call.1} parent=5 // pred_region
        %s192 = ssub.s32 %s17, 1
        %s193 = sand.u32 %s53, 1
        %s194 = scalar_lea.sflag [#allocation3], %s193
        %s195 = sand.u32 %s53, 1
        %s196 = smul.addr %s195, 8
        %s197 = scalar_lea.vmem [#allocation2], %s196
        // Predicated region
        $region29: #{tpu_custom_call.1} parent=27 // pred_check
          %p198 = pneg %p66
        $region30: #{tpu_custom_call.1} parent=27 // pred_check_branch
          %200 = sbr.rel (%p198) target = $region32
        $region31: #{tpu_custom_call.1} parent=27 // pred_region
          %201 = dma.done %s194, 128
        $region32: #{tpu_custom_call.1} parent=27 // pred_fallthru
          _
        %s202 = sand.u32 %s83, 1
        %s203 = scalar_lea.sflag [#allocation6], %s202
        %s204 = sand.u32 %s83, 1
        %s205 = smul.addr %s204, 2
        %s206 = scalar_lea.vmem [#allocation5], %s205
        // Predicated region
        $region33: #{tpu_custom_call.1} parent=27 // pred_check
          %p207 = pneg %p96
        $region34: #{tpu_custom_call.1} parent=27 // pred_check_branch
          %209 = sbr.rel (%p207) target = $region36
        $region35: #{tpu_custom_call.1} parent=27 // pred_region
          %210 = dma.done %s203, 32
        $region36: #{tpu_custom_call.1} parent=27 // pred_fallthru
          _
        %s211 = sand.u32 %s53, 1
        %s212 = scalar_lea.sflag [#allocation3], %s211
        %s213 = sand.u32 %s53, 1
        %s214 = smul.addr %s213, 8
        %s215 = scalar_lea.vmem [#allocation2], %s214
        %p216 = pneg %p66
        %p217 = pneg %p63
        %s218 = sand.u32 %s83, 1
        %s219 = scalar_lea.sflag [#allocation6], %s218
        %s220 = sand.u32 %s83, 1
        %s221 = smul.addr %s220, 2
        %s222 = scalar_lea.vmem [#allocation5], %s221
        %p223 = pneg %p96
        %p224 = pneg %p93
        %p225 = pneg %p124
        %p226 = pneg %p121
        %s227 = sand.u32 %s111, 1
        %s228 = scalar_lea.sflag [#allocation4], %s227
        %s229 = sand.u32 %s111, 1
        %s230 = smul.addr %s229, 24
        %s231 = scalar_lea.vmem [#allocation7], %s230
        %s232 = sadd.s32 %s28, %s29
        %s233 = sadd.s32 %s28, %s29
        %p234 = scmp.eq.s32.totalorder %s29, 0
        // Predicated region
        $region37: #{tpu_custom_call.1} parent=27 // pred_check
          %p235 = pneg %p234
        $region38: #{tpu_custom_call.1} parent=27 // pred_check_branch
          %237 = sbr.rel (%p235) target = $region40
        $region39: #{tpu_custom_call.1} parent=27 // pred_region
          %238 = vst [vmem:[%s231] sm:$0xff] 0.0
          %239 = vst [vmem:[%s231 + $0x8] sm:$0xff] 0.0
          %240 = vst [vmem:[%s231 + $0x10] sm:$0xff] 0.0
        $region40: #{tpu_custom_call.1} parent=27 // pred_fallthru
          _
        %v241 = vld [vmem:[%s206] sm:$0x3]
        %v242 = vld [vmem:[%s197] sm:$0x3]
        %vm243 = vcmp.eq.s32.totalorder %v241, 0
        %v244 = vsel %vm243, %v242, 0.0
        %s245 = scalar_lea.vmem %s197, 2 [#allocation2]
        %v246 = vld [vmem:[%s245] sm:$0x3]
        %v247 = vmax.f32 %v242, %v246
        %vm248 = vcmp.eq.s32.totalorder %v241, 1
        %v249 = vsel %vm248, %v246, %v244
        %s250 = scalar_lea.vmem %s197, 4 [#allocation2]
        %v251 = vld [vmem:[%s250] sm:$0x3]
        %v252 = vmax.f32 %v247, %v251
        %vm253 = vcmp.eq.s32.totalorder %v241, 2
        %v254 = vsel %vm253, %v251, %v249
        %s255 = scalar_lea.vmem %s197, 6 [#allocation2]
        %v256 = vld [vmem:[%s255] sm:$0x3]
        %v257 = vmax.f32 %v252, %v256
        %vm258 = vcmp.eq.s32.totalorder %v241, 3
        %v259 = vsel %vm258, %v256, %v254
        %v260 = vsub.f32 %v242, %v257
        %v261 = vmul.f32 %v260, 1.442695
        %v262 = vpow.pop %v261
        %v263 = vsub.f32 %v246, %v257
        %v264 = vmul.f32 %v263, 1.442695
        %v265 = vpow.pop %v264
        %v266 = vadd.f32 %v262, %v265
        %v267 = vsub.f32 %v251, %v257
        %v268 = vmul.f32 %v267, 1.442695
        %v269 = vpow.pop %v268
        %v270 = vadd.f32 %v266, %v269
        %v271 = vsub.f32 %v256, %v257
        %v272 = vmul.f32 %v271, 1.442695
        %v273 = vpow.pop %v272
        %v274 = vadd.f32 %v270, %v273
        %v275 = vlog2.pop %v274
        %v276 = vmul.f32 %v275, 0.6931472
        %v277 = vadd.f32 %v257, %v276
        %v278 = vsub.f32 %v277, %v259
        %v279 = vsub.f32 0.0, %v278
        %v280 = vmul.f32 %v279, 1.442695
        %v281 = vpow.pop %v280
        %v282 = vsub.f32 1.0, %v281
        %v283 = vmul.f32 %v282, 9.2103405
        %vm284 = vcmp.ne.s32.totalorder %v241, 4294967196
        %v285 = vld [vmem:[%s231] sm:$0xff]
        %v286 = vsel %vm284, %v278, 0.0
        %v287 = vlaneseq
        %v288 = vshrl.u32 %v287, 7
        %vm289 = vcmp.eq.s32.totalorder %v288, 0
        %vm290 = vcmask 1041408
        %v291 = vsel %vm290, %v286, 0.0
        %v292 = vrot.slane %v291, 4
        %v293 = vadd.f32 %v291, %v292
        %v294 = vrot.slane %v293, 2
        %v295 = vadd.f32 %v293, %v294
        %v296 = vrot.slane %v295, 1
        %v297 = vadd.f32 %v295, %v296
        %v298 = vsel %vm289, %v297, 0.0
        %v299 = vadd.f32 %v285, %v298
        %300 = vst [vmem:[%s231] sm:$0xff] %v299
        %s301 = scalar_lea.vmem %s231, 8 [#allocation7]
        %v302 = vld [vmem:[%s301] sm:$0xff]
        %v303 = vsel %vm284, %v283, 0.0
        %v304 = vsel %vm290, %v303, 0.0
        %v305 = vrot.slane %v304, 4
        %v306 = vadd.f32 %v304, %v305
        %v307 = vrot.slane %v306, 2
        %v308 = vadd.f32 %v306, %v307
        %v309 = vrot.slane %v308, 1
        %v310 = vadd.f32 %v308, %v309
        %v311 = vsel %vm289, %v310, 0.0
        %v312 = vadd.f32 %v302, %v311
        %313 = vst [vmem:[%s301] sm:$0xff] %v312
        %s314 = scalar_lea.vmem %s231, 16 [#allocation7]
        %v315 = vld [vmem:[%s314] sm:$0xff]
        %v316 = vsel %vm284, 1, 0
        %v317 = vcvt.s32.f32 %v316
        %v318 = vsel %vm290, %v317, 0.0
        %v319 = vrot.slane %v318, 4
        %v320 = vadd.f32 %v318, %v319
        %v321 = vrot.slane %v320, 2
        %v322 = vadd.f32 %v320, %v321
        %v323 = vrot.slane %v322, 1
        %v324 = vadd.f32 %v322, %v323
        %v325 = vsel %vm289, %v324, 0.0
        %v326 = vadd.f32 %v315, %v325
        %327 = vst [vmem:[%s314] sm:$0xff] %v326
        %s328 = sand.u32 %s111, 1
        %s329 = scalar_lea.sflag [#allocation4], %s328
        %s330 = sand.u32 %s111, 1
        %s331 = smul.addr %s330, 24
        %s332 = scalar_lea.vmem [#allocation7], %s331
        // Predicated region
        $region41: #{tpu_custom_call.1} parent=27 // pred_check
          %p333 = pneg %p121
        $region42: #{tpu_custom_call.1} parent=27 // pred_check_branch
          %335 = sbr.rel (%p333) target = $region44
        $region43: #{tpu_custom_call.1} parent=27 // pred_region
          %s337 = ssub.s32 384, 384
          %338 = vsyncadd %s329, %s337
          %s339 = smul.addr %s28, 3
          %s340 = smul.addr %s27, 3
          %s341 = sadd.s32 %s339, %s340
          %s342 = smul.addr %s341, 128
          %s343 = scalar_lea.hbm %s2, %s342
          %s344 = sshll.u32 %s332, 4
          %s345 = int_to_ptr.vmem [resolvable:$true] %s344
          %350 = dma.vmem_to_hbm [thread:$0]  %s345, 384, %s343, %s329, 128, 128, 8
        $region44: #{tpu_custom_call.1} parent=27 // pred_fallthru
          _
      $region28: #{tpu_custom_call.1} parent=5 // pred_fallthru
        _
      %p351 = scmp.le.s32.totalorder 2, %s17
      // Predicated region
      $region45: #{tpu_custom_call.1} parent=5 // pred_check
        %p352 = pneg %p351
      $region46: #{tpu_custom_call.1} parent=5 // pred_check_branch
        %354 = sbr.rel (%p352) target = $region48
      $region47: #{tpu_custom_call.1} parent=5 // pred_region
        %s355 = ssub.s32 %s17, 2
        // Predicated region
        $region49: #{tpu_custom_call.1} parent=47 // pred_check
          %p356 = pneg %p127
        $region50: #{tpu_custom_call.1} parent=47 // pred_check_branch
          %358 = sbr.rel (%p356) target = $region52
        $region51: #{tpu_custom_call.1} parent=47 // pred_region
          %s359 = sand.u32 %s112, 1
          %s360 = scalar_lea.sflag [#allocation4], %s359
          %s361 = sand.u32 %s112, 1
          %s362 = smul.addr %s361, 24
          %s363 = scalar_lea.vmem [#allocation7], %s362
          %364 = dma.done %s360, 384
        $region52: #{tpu_custom_call.1} parent=47 // pred_fallthru
          _
      $region48: #{tpu_custom_call.1} parent=5 // pred_fallthru
        _
    $region6: #{tpu_custom_call.1} parent=1 // loop_footer
      %s21 = sadd.s32 1, %s17
    $region7: #{tpu_custom_call.1} parent=1 // loop_footer_branch
      %16 = sbr.rel target = $region3
    $region8: #{tpu_custom_call.1} parent=1 // loop_exit
      _
    %365 = vsyncpa [#allocation3], 1
    %s366 = scalar_lea.sflag [#allocation3], 1
    %367 = vsyncpa %s366, 1
    %368 = vsyncpa [#allocation6], 1
    %s369 = scalar_lea.sflag [#allocation6], 1
    %370 = vsyncpa %s369, 1
    %371 = vsyncpa [#allocation4], 1
    %s372 = scalar_lea.sflag [#allocation4], 1
    %373 = vsyncpa %s372, 1

</llo_original>
